<compile_context>
chip_gen: v7x
topology: tpu7x:2x2x1
jax: 0.10.0
libtpu: 0.0.40
codegen_flags: <defaults>
</compile_context>

<pallas_src>
import functools

import jax
import jax.numpy as jnp
from jax.experimental import pallas as pl
from jax.experimental.pallas import tpu as pltpu

_LANE_W = 512                         # lane-dense slab width (multiple of 128)
_MIN_PALLAS_BYTES = 4 * 1024 * 1024   # below this, fused XLA elementwise is already at roofline
_RAGGED_QUANTUM = 4096                # 1-D block quantum (covers (32,128) packing of 1-byte dtypes)


def _sublane_min(dtype):
    """Minimum second-to-last tile dim for the dtype's sublane packing."""
    return {4: 8, 2: 16, 1: 32}.get(jnp.dtype(dtype).itemsize, 8)


def _round_up(a, m):
    return ((a + m - 1) // m) * m


@functools.lru_cache(maxsize=1)
def _target_block_bytes():
    """Per-stream block budget, scaled to the chip generation's HBM bandwidth."""
    try:
        kind = jax.devices()[0].device_kind.lower()
    except Exception:
        return 2 * 1024 * 1024
    if "v7" in kind or "7x" in kind:
        return 8 * 1024 * 1024   # ~3.2 TB/s per TC: amortize ~0.35us/grid-step overhead
    if "v6" in kind:
        return 4 * 1024 * 1024   # measured ~86% of HBM roofline at >=1024-row f32 tiles
    return 2 * 1024 * 1024       # v5e & unknown: keep total buffers at 8 MiB


def _vmem_limit_bytes(block_elems, in_isz, out_isz):
    # Double-buffered input + output blocks, plus a little headroom.
    buffers = 2 * block_elems * (in_isz + out_isz)
    return int(max(16 * 1024 * 1024, buffers + 2 * 1024 * 1024))


def _make_kernel(fn, out_dtype):
    def kernel(x_ref, o_ref):
        o_ref[...] = fn(x_ref[...]).astype(out_dtype)
    return kernel


def _pallas_elementwise(fn, arr, block_shape, out_dtype, *, donate, vmem_limit):
    """Stream `fn` over `arr` (1-D or 2-D) tiled along the leading axis."""
    lead_tile = block_shape[0]
    grid = (pl.cdiv(arr.shape[0], lead_tile),)
    if arr.ndim == 2:
        index_map = lambda i: (i, 0)
    else:
        index_map = lambda i: (i,)
    # Aliasing is only legal when dtypes match (elementwise, identical index maps).
    alias = {0: 0} if (donate and jnp.dtype(out_dtype) == jnp.dtype(arr.dtype)) else {}
    return pl.pallas_call(
        _make_kernel(fn, out_dtype),
        out_shape=jax.ShapeDtypeStruct(arr.shape, out_dtype),
        grid_spec=pltpu.PrefetchScalarGridSpec(
            num_scalar_prefetch=0,
            grid=grid,
            in_specs=[pl.BlockSpec(block_shape, index_map)],
            out_specs=pl.BlockSpec(block_shape, index_map),
        ),
        compiler_params=pltpu.CompilerParams(
            dimension_semantics=("parallel",),
            vmem_limit_bytes=vmem_limit,
        ),
        input_output_aliases=alias,
    )(arr)


def _choose_row_tile(rows, cols, in_isz, out_isz, sub_min, block_budget):
    if rows <= sub_min:
        return rows  # single full block (full dims bypass the (8,128) divisibility rule)
    target = (2 * block_budget) // (cols * (in_isz + out_isz))
    target = max(sub_min, (target // sub_min) * sub_min)
    if target >= rows:
        # Whole array fits one block: split into 2 near-equal grid steps so v7x's
        # 2 TensorCores both get work and pipelining overlaps DMA with compute.
        return min(rows, _round_up(-(-rows // 2), sub_min))
    # Prefer a tile that divides `rows` (full last block -> unmasked stores),
    # searching slightly below the bandwidth-optimal target.
    d = target
    floor = max(sub_min, (3 * target) // 4)
    while d >= floor:
        if rows % d == 0:
            return d
        d -= sub_min
    return target


def _choose_1d_block(n, in_isz, out_isz, block_budget):
    if n <= _RAGGED_QUANTUM:
        return n
    target = (2 * block_budget) // (in_isz + out_isz)
    target = max(_RAGGED_QUANTUM, (target // _RAGGED_QUANTUM) * _RAGGED_QUANTUM)
    if target >= n:
        return min(n, _round_up(-(-n // 2), _RAGGED_QUANTUM))
    return target


def apply_elementwise(fn, x, *, min_pallas_bytes=_MIN_PALLAS_BYTES, donate_input=False):
    """Apply `fn` to `x`; large elementwise fns run in a tiled Pallas TPU kernel."""
    n = x.size
    in_isz = jnp.dtype(x.dtype).itemsize
    if n == 0 or n * in_isz < min_pallas_bytes:
        return fn(x)

    # The tiled path assumes `fn` is elementwise (shape-preserving and position-
    # independent).  Anything else falls back to plain JAX rather than silently
    # producing wrong results.  Note: padded edge blocks feed garbage into `fn`
    # (masked out on store) — fine for arithmetic, not for asserts/debug prints.
    try:
        out_aval = jax.eval_shape(fn, jax.ShapeDtypeStruct(x.shape, x.dtype))
        out_shape, out_dtype = out_aval.shape, out_aval.dtype
    except Exception:
        return fn(x)
    if out_shape != x.shape:
        # TODO(synk): shape-changing / reducing fns have no generic Pallas tiling.
        return fn(x)
    out_isz = jnp.dtype(out_dtype).itemsize

    block_budget = _target_block_bytes()
    flat = x.reshape(-1)

    if n % _LANE_W == 0:
        # Common case: zero-copy reshape into a lane-dense (rows, 512) slab.
        rows = n // _LANE_W
        sub_min = max(_sublane_min(x.dtype), _sublane_min(out_dtype))
        row_tile = _choose_row_tile(rows, _LANE_W, in_isz, out_isz, sub_min, block_budget)
        vmem_limit = _vmem_limit_bytes(row_tile * _LANE_W, in_isz, out_isz)
        out = _pallas_elementwise(
            fn, flat.reshape(rows, _LANE_W), (row_tile, _LANE_W), out_dtype,
            donate=donate_input, vmem_limit=vmem_limit)
    else:
        # Ragged element count: stay 1-D so Pallas masks the partial last block.
        # No slice / pad / concatenate copies: exactly 1x read + 1x write of HBM.
        blk = _choose_1d_block(n, in_isz, out_isz, block_budget)
        vmem_limit = _vmem_limit_bytes(blk, in_isz, out_isz)
        out = _pallas_elementwise(
            fn, flat, (blk,), out_dtype, donate=donate_input, vmem_limit=vmem_limit)

    return out.reshape(x.shape)


class Lambda:
    """JAX/Pallas equivalent of the PyTorch `Lambda` nn.Module: forward(x) == fn(x).

    Large elementwise fns execute inside a tiled Pallas TPU kernel; small arrays
    and non-elementwise fns use plain JAX (identical semantics).
    """

    def __init__(self, fn, *, use_pallas=True, min_pallas_bytes=_MIN_PALLAS_BYTES,
                 donate_input=False):
        self.fn = fn
        self.use_pallas = use_pallas
        self.min_pallas_bytes = min_pallas_bytes
        # Only enable when the caller's input buffer is dead after the call
        # (e.g. inside a larger jit); in eager mode aliasing forces an extra
        # defensive XLA copy.
        self.donate_input = donate_input

    def __call__(self, x):
        if not self.use_pallas:
            return self.fn(x)
        return apply_elementwise(self.fn, x,
                                 min_pallas_bytes=self.min_pallas_bytes,
                                 donate_input=self.donate_input)


if __name__ == "__main__":
    key = jax.random.PRNGKey(0)
    norm_fn = lambda v: 2.0 * v - 1.0   # the [0,1] -> [-1,1] Lambda in fourier_analysis

    # 1) Small NCHW input (as in the spec): plain-JAX fast path.
    x_small = jax.random.uniform(key, (2, 4, 16, 16), dtype=jnp.float32)
    mod = Lambda(norm_fn)
    y_small = jax.block_until_ready(mod(x_small))
    assert y_small.shape == x_small.shape and y_small.dtype == x_small.dtype
    assert jnp.allclose(y_small, 2.0 * x_small - 1.0, atol=1e-6, rtol=1e-6)

    # 2) Force the Pallas kernel on the same small input (2-D path, full block).
    mod_forced = Lambda(norm_fn, min_pallas_bytes=0)
    y_forced = jax.block_until_ready(mod_forced(x_small))
    assert jnp.allclose(y_forced, 2.0 * x_small - 1.0, atol=1e-6, rtol=1e-6)

    # 3) Larger input exercising the tiled multi-block path (grid >= 2).
    x_big = jax.random.uniform(jax.random.PRNGKey(0), (2, 4, 256, 512),
                               dtype=jnp.float32)
    y_big = jax.block_until_ready(mod(x_big))
    assert jnp.allclose(y_big, 2.0 * x_big - 1.0, atol=1e-6, rtol=1e-6)

    # 4) Ragged element count, tiny: 1-D path, single full-dim block.
    x_rag = jax.random.uniform(jax.random.PRNGKey(0), (3, 5, 7, 11),
                               dtype=jnp.float32)
    y_rag = jax.block_until_ready(mod_forced(x_rag))
    assert jnp.allclose(y_rag, 2.0 * x_rag - 1.0, atol=1e-6, rtol=1e-6)

    # 5) Ragged element count, multi-block: 1-D path with masked partial last block.
    x_rag2 = jax.random.uniform(jax.random.PRNGKey(0), (2, 4, 37, 131),
                                dtype=jnp.float32)
    y_rag2 = jax.block_until_ready(mod_forced(x_rag2))
    assert jnp.allclose(y_rag2, 2.0 * x_rag2 - 1.0, atol=1e-6, rtol=1e-6)

    # 6) dtype-changing fn: out dtype derived from jax.eval_shape (aliasing disabled).
    cast_fn = lambda v: (2.0 * v - 1.0).astype(jnp.bfloat16)
    mod_cast = Lambda(cast_fn, min_pallas_bytes=0)
    y_cast = jax.block_until_ready(mod_cast(x_small))
    assert y_cast.dtype == jnp.bfloat16
    assert jnp.allclose(y_cast.astype(jnp.float32), 2.0 * x_small - 1.0,
                        atol=1e-2, rtol=1e-2)

    # 7) donate_input=True exercises input_output_aliases={0: 0}.
    mod_donate = Lambda(norm_fn, min_pallas_bytes=0, donate_input=True)
    y_donate = jax.block_until_ready(mod_donate(x_small))
    assert jnp.allclose(y_donate, 2.0 * x_small - 1.0, atol=1e-6, rtol=1e-6)

    print("KERNEL_OK")
</pallas_src>

<mosaic_0001>
module attributes {stable_mosaic.version = 11 : i64} {
  func.func @kernel(%arg0: i32, %arg1: memref<4x512xf32, #tpu.memory_space<vmem>>, %arg2: memref<4x512xf32, #tpu.memory_space<vmem>>) attributes {dimension_semantics = [#tpu.dimension_semantics<parallel>], iteration_bounds = array<i64: 1>, scalar_prefetch = 0 : i64, scratch_operands = 0 : i64, tpu.core_type = #tpu.core_type<tc>, window_params = [{transform_indices = @transform_0, window_bounds = array<i64: 4, 512>}, {transform_indices = @transform_1, window_bounds = array<i64: 4, 512>}]} {
    %c0 = arith.constant 0 : index
    %c0_0 = arith.constant 0 : index
    %0 = vector.load %arg1[%c0, %c0_0] : memref<4x512xf32, #tpu.memory_space<vmem>>, vector<4x512xf32>
    %cst = arith.constant 2.000000e+00 : f32
    %1 = vector.broadcast %cst : f32 to vector<4x512xf32>
    %2 = arith.mulf %1, %0 : vector<4x512xf32>
    %cst_1 = arith.constant 1.000000e+00 : f32
    %3 = vector.broadcast %cst_1 : f32 to vector<4x512xf32>
    %4 = arith.subf %2, %3 : vector<4x512xf32>
    %c0_2 = arith.constant 0 : index
    %c0_3 = arith.constant 0 : index
    %5 = vector.load %arg2[%c0_2, %c0_3] : memref<4x512xf32, #tpu.memory_space<vmem>>, vector<4x512xf32>
    tpu.vector_store %arg2[%c0_2, %c0_3], %4 {strides = array<i32>} : memref<4x512xf32, #tpu.memory_space<vmem>>, vector<4x512xf32>,
    return
  }
  func.func @transform_0(%arg0: i32) -> (i32, i32) {
    %c0_i32 = arith.constant 0 : i32
    %c0_i32_0 = arith.constant 0 : i32
    return %arg0, %c0_i32 : i32, i32
  }
  func.func @transform_1(%arg0: i32) -> (i32, i32) {
    %c0_i32 = arith.constant 0 : i32
    %c0_i32_0 = arith.constant 0 : i32
    return %arg0, %c0_i32 : i32, i32
  }
}

</mosaic_0001>

<llo_original>
// kernel: tpu_custom_call.1
$region0: #{tpu_custom_call.1}
  #allocation0 [shape = 'u32[]', space=smem, size = 0x4, offset = 0x4, fixed_abs, tag = 'smem constant byte address 0x4 - core index']
  #allocation1 [shape = 'u32[144,128]{1,0:T(1,128)}', space=vmem, size = 0x12000, scoped, tag = 'internal scratch']
  %s0 = inlined_call_operand.hbm [shape: f32[4,512], index: 0, kind: input, shape index: {}]
  %s1 = inlined_call_operand.hbm [shape: f32[4,512], index: 1, kind: output, shape index: {}]
  %s2 = sld [smem:[#allocation0]]
  $region18: #{tpu_custom_call.1} parent=0
    _
  %s4 = ssub.s32 1, %s2
  %s5 = scalar_select 0, %s4, %s2
  $region1: #{tpu_custom_call.1} parent=0
    #allocation2 [shape = 'u8[8192]{0}', space=vmem, size = 0x2000, scoped, tag = 'input window, operand 0, single buffered']
    #allocation3 [shape = 's32[1]{0}', space=sflag, size = 0x4, scoped, tag = 'scoped memory for tpu_custom_call.1']
    #allocation4 [shape = 's32[1]{0}', space=sflag, size = 0x4, scoped, tag = 'scoped memory for tpu_custom_call.1']
    #allocation5 [shape = 'u8[8192]{0}', space=vmem, size = 0x2000, scoped, tag = 'output window, operand 0, single buffered']
    %6 = vsyncpa [#allocation3], 0
    %7 = vsyncpa [#allocation4], 0
    // Predicated region
    $region2: #{tpu_custom_call.1} parent=1 // pred_check
      _
    $region3: #{tpu_custom_call.1} parent=1 // pred_check_branch
      %9 = sbr.rel (0) target = $region5
    $region4: #{tpu_custom_call.1} parent=1 // pred_region
      %s11 = ssub.s32 256, 256
      %12 = vsyncadd [#allocation3], %s11
      %s14 = sshll.u32 [#allocation2], 4
      %s15 = int_to_ptr.vmem [resolvable:$true] %s14
      %17 = dma.hbm_to_vmem [thread:$0]  %s0, 256, %s15, [#allocation3]
    $region5: #{tpu_custom_call.1} parent=1 // pred_fallthru
      _
    // Predicated region
    $region6: #{tpu_custom_call.1} parent=1 // pred_check
      _
    $region7: #{tpu_custom_call.1} parent=1 // pred_check_branch
      %19 = sbr.rel (0) target = $region9
    $region8: #{tpu_custom_call.1} parent=1 // pred_region
      %20 = dma.done [#allocation3], 256
    $region9: #{tpu_custom_call.1} parent=1 // pred_fallthru
      _
    %v21 = vld [vmem:[#allocation2] sm:$0xff]
    %v22 = vld [vmem:[#allocation2 + $0x8] sm:$0xff]
    %v23 = vmul.f32 %v21, 2.0
    %v24 = vmul.f32 %v22, 2.0
    %v25 = vsub.f32 %v23, 1.0
    %v26 = vsub.f32 %v24, 1.0
    %27 = vst [vmem:[#allocation5] sm:$0xff] %v25
    %28 = vst [vmem:[#allocation5 + $0x8] sm:$0xff] %v26
    // Predicated region
    $region10: #{tpu_custom_call.1} parent=1 // pred_check
      _
    $region11: #{tpu_custom_call.1} parent=1 // pred_check_branch
      %30 = sbr.rel (0) target = $region13
    $region12: #{tpu_custom_call.1} parent=1 // pred_region
      %s32 = ssub.s32 256, 256
      %33 = vsyncadd [#allocation4], %s32
      %s35 = sshll.u32 [#allocation5], 4
      %s36 = int_to_ptr.vmem [resolvable:$true] %s35
      %38 = dma.vmem_to_hbm [thread:$0]  %s36, 256, %s1, [#allocation4]
    $region13: #{tpu_custom_call.1} parent=1 // pred_fallthru
      _
    // Predicated region
    $region14: #{tpu_custom_call.1} parent=1 // pred_check
      _
    $region15: #{tpu_custom_call.1} parent=1 // pred_check_branch
      %40 = sbr.rel (0) target = $region17
    $region16: #{tpu_custom_call.1} parent=1 // pred_region
      %41 = dma.done [#allocation4], 256
    $region17: #{tpu_custom_call.1} parent=1 // pred_fallthru
      _
    %42 = vsyncpa [#allocation3], 1
    %43 = vsyncpa [#allocation4], 1

</llo_original>
